<compile_context>
chip_gen: v5e
topology: v5e:2x2
jax: 0.10.0
libtpu: 0.0.40
codegen_flags: <defaults>
</compile_context>

<pallas_src>
import jax
import jax.numpy as jnp
from jax.experimental import pallas as pl
from jax.experimental.pallas import tpu as pltpu

# Problem sizes (consistent with a [2, 4, 16, 16] NCHW input).
N, CIN, H, W = 2, 4, 16, 16
COUT, KH, KW = 8, 3, 3
NUM_CLASSES = 10

HP, WP = H + 2, W + 2                 # spatially padded dims (pad=1): 18, 18
ROWS = (N - 1) * HP + H               # 34: row window covering every batch's valid rows
ROWS_PAD = 40                         # rows padded to a sublane multiple of 8
K_IM2COL = KH * WP * CIN              # 216: lanes of the im2col-lite operand
K_PAD = 256                           # padded to native MXU K depth
LANES = W * COUT                      # 128: conv output lanes (x * COUT + cout)

# Packed-constant slab layout (f32, shape (C_ROWS, 128)):
#   rows 0..127   : wfold  (classifier weight tiled over x, zero-padded lanes >= 10)
#   row  128      : b1     (conv bias tiled over x)
#   row  129      : b2     (classifier bias, zero-padded lanes >= 10)
#   rows 136..143 : pool   (batch-block mean matrix, 1/(H*W) folded in; 8-aligned)
B1_ROW = 128
B2_ROW = 129
POOL_ROW0 = 136
C_ROWS = 144


def swag_forward_kernel(x_ref, w_ref, c_ref, out_ref):
    # x   : (40, 256)  bf16  im2col-lite input (3 dy row-windows stacked on lanes)
    # w   : (256, 128) bf16  stacked block-banded conv weights
    # c   : (144, 128) f32   packed constants (wfold / b1 / b2 / pool)
    # out : (8, 128)   f32   lane-dense padded logits (valid region [:2, :10])
    #
    # Conv2d(pad=1) as ONE MXU matmul, f32 accumulation.
    h = jnp.dot(x_ref[...], w_ref[...], preferred_element_type=jnp.float32)   # (40, 128)
    # Bias + ReLU in f32 on the VPU.  Rows 16..17 (batch-boundary padding rows)
    # and 34..39 (sublane padding -> relu(bias)) are finite and are zeroed out
    # by the pool matrix below, so 0 * x never sees a non-finite value.
    h = jnp.maximum(h + c_ref[B1_ROW:B1_ROW + 1, :], 0.0)
    h_bf = h.astype(jnp.bfloat16)

    # Global average pool over y (pool matrix rows) and x (wfold tiling), plus
    # the linear head: two tiny bf16 MXU matmuls with f32 accumulation.  The
    # 1/(H*W) = 1/256 scale lives in `pool` and is exact in bf16.
    pool = c_ref[POOL_ROW0:POOL_ROW0 + 8, 0:ROWS_PAD].astype(jnp.bfloat16)    # (8, 40)
    wfold = c_ref[0:LANES, :].astype(jnp.bfloat16)                            # (128, 128)
    pooled = jnp.dot(pool, h_bf, preferred_element_type=jnp.float32)          # (8, 128)
    logits = jnp.dot(pooled.astype(jnp.bfloat16), wfold,
                     preferred_element_type=jnp.float32)                      # (8, 128)
    out_ref[...] = logits + c_ref[B2_ROW:B2_ROW + 1, :]


def prepare_swag_params(w_conv, b_conv, w_fc, b_fc):
    """One-time parameter re-layout (hoisted out of the per-call forward path).

    w_conv : (COUT, CIN, KH, KW)  PyTorch OIHW conv weight
    b_conv : (COUT,)
    w_fc   : (NUM_CLASSES, COUT)  PyTorch Linear weight
    b_fc   : (NUM_CLASSES,)
    Returns (wstack_bf16 (256,128), cpack_f32 (144,128)).
    """
    # Per-dy block-banded conv weights with dx folded in:
    #   W_dy[x'*CIN + cin, x*COUT + cout] = w[dy, x'-x, cin, cout] if 0<=x'-x<KW else 0
    # then stacked along dy (rows dy*WP*CIN + x'*CIN + cin) and zero-padded to K=256.
    w_hwio = jnp.transpose(w_conv, (2, 3, 1, 0))          # (KH, KW, CIN, COUT)
    xp = jnp.arange(WP)[:, None, None]
    xo = jnp.arange(W)[None, :, None]
    dxs = jnp.arange(KW)[None, None, :]
    sel = (xp == xo + dxs).astype(jnp.float32)            # (WP, W, KW)
    w_all = jnp.einsum('pxd,ydco->ypcxo', sel, w_hwio)    # (KH, WP, CIN, W, COUT)
    wstack = w_all.reshape(K_IM2COL, LANES)
    wstack = jnp.pad(wstack, ((0, K_PAD - K_IM2COL), (0, 0))).astype(jnp.bfloat16)

    # Conv bias tiled so column x*COUT+cout picks b_conv[cout].
    b1 = jnp.tile(b_conv.astype(jnp.float32), W)                               # (128,)

    # Classifier weight tiled over x-positions (row x*COUT+cout -> w_fc[:, cout]),
    # zero-padded to 128 output lanes.
    wfold = jnp.pad(jnp.tile(jnp.transpose(w_fc), (W, 1)),
                    ((0, 0), (0, LANES - NUM_CLASSES))).astype(jnp.float32)    # (128, 128)
    b2 = jnp.pad(b_fc, (0, LANES - NUM_CLASSES)).astype(jnp.float32)           # (128,)

    # Pool matrix: picks each batch's H valid rows out of the 40-row h slab and
    # applies the 1/(H*W) mean scale; padded/garbage rows get exactly 0.
    r = jnp.arange(LANES)[None, :]
    n = jnp.arange(8)[:, None]
    in_batch = (n < N) & (r >= n * HP) & (r < n * HP + H)
    pool = jnp.where(in_batch, 1.0 / (H * W), 0.0).astype(jnp.float32)         # (8, 128)

    cpack = jnp.zeros((C_ROWS, LANES), jnp.float32)
    cpack = cpack.at[0:LANES, :].set(wfold)
    cpack = cpack.at[B1_ROW, :].set(b1)
    cpack = cpack.at[B2_ROW, :].set(b2)
    cpack = cpack.at[POOL_ROW0:POOL_ROW0 + 8, :].set(pool)
    return wstack, cpack


@jax.jit
def swag_forward(x_nchw, wstack, cpack):
    """Forward of SWAG(base) where base = Conv2d -> ReLU -> GAP -> Linear.

    The wrapper only does the tiny (~20 KB) input re-layout: NCHW->NHWC, pad,
    flatten, stack the 3 dy-shifted row windows along lanes, cast to bf16.  All
    compute (conv matmul, bias+ReLU, pooling, classifier) is in the kernel.
    """
    x_nhwc = jnp.transpose(x_nchw, (0, 2, 3, 1))                       # (N, H, W, CIN)
    xpad = jnp.pad(x_nhwc, ((0, 0), (1, 1), (1, 1), (0, 0)))           # (N, 18, 18, CIN)
    xflat = xpad.reshape(N * HP, WP * CIN)                             # (36, 72)
    x_cat = jnp.concatenate([xflat[dy:dy + ROWS, :] for dy in range(KH)], axis=1)  # (34, 216)
    x_im2col = jnp.pad(x_cat, ((0, ROWS_PAD - ROWS),
                               (0, K_PAD - K_IM2COL))).astype(jnp.bfloat16)         # (40, 256)

    vmem = pl.BlockSpec(memory_space=pltpu.MemorySpace.VMEM)
    out_pad = pl.pallas_call(
        swag_forward_kernel,
        out_shape=jax.ShapeDtypeStruct((8, LANES), jnp.float32),
        in_specs=[vmem, vmem, vmem],
        out_specs=vmem,
    )(x_im2col, wstack, cpack)
    return out_pad[:N, :NUM_CLASSES]


def swag_forward_reference(x_nchw, w_conv, b_conv, w_fc, b_fc):
    """Pure-JAX reference (mirrors the PyTorch base forward)."""
    y = jax.lax.conv_general_dilated(
        x_nchw, w_conv, window_strides=(1, 1), padding="SAME",
        dimension_numbers=("NCHW", "OIHW", "NCHW"))
    y = y + b_conv.reshape(1, COUT, 1, 1)
    y = jnp.maximum(y, 0.0)
    pooled = jnp.mean(y, axis=(2, 3))  # (N, COUT)
    return pooled @ w_fc.T + b_fc


if __name__ == "__main__":
    key = jax.random.PRNGKey(0)
    kx, kw1, kb1, kw2, kb2 = jax.random.split(key, 5)

    x = jax.random.normal(kx, (N, CIN, H, W), dtype=jnp.float32)
    # Deterministic synthetic parameters (shapes implied by the base model).
    w_conv = 0.1 * jax.random.normal(kw1, (COUT, CIN, KH, KW), dtype=jnp.float32)
    b_conv = 0.1 * jax.random.normal(kb1, (COUT,), dtype=jnp.float32)
    w_fc = 0.1 * jax.random.normal(kw2, (NUM_CLASSES, COUT), dtype=jnp.float32)
    b_fc = 0.1 * jax.random.normal(kb2, (NUM_CLASSES,), dtype=jnp.float32)

    # One-time parameter re-layout (hoisted out of the per-call path).
    wstack, cpack = prepare_swag_params(w_conv, b_conv, w_fc, b_fc)

    out = swag_forward(x, wstack, cpack)
    jax.block_until_ready(out)

    ref = swag_forward_reference(x, w_conv, b_conv, w_fc, b_fc)
    assert out.shape == (N, NUM_CLASSES)
    # All MXU operands are bf16 (f32 accumulation; bias adds in f32), so use a
    # tolerance appropriate for a bf16 pipeline.
    assert jnp.allclose(out, ref, rtol=2e-2, atol=5e-3), "mismatch vs reference"

    # TODO(synk): SWAG statistics methods (collect_model / sample /
    # get_covariance_matrix / get_mean_vector) are training-time, host-side
    # buffer bookkeeping, not part of forward(); not implemented as kernels.
    print("KERNEL_OK")
</pallas_src>

<mosaic_0001>
module attributes {stable_mosaic.version = 11 : i64} {
  func.func @swag_forward_kernel(%arg0: memref<40x256xbf16, #tpu.memory_space<vmem>>, %arg1: memref<256x128xbf16, #tpu.memory_space<vmem>>, %arg2: memref<144x128xf32, #tpu.memory_space<vmem>>, %arg3: memref<8x128xf32, #tpu.memory_space<vmem>>) attributes {dimension_semantics = [], scalar_prefetch = 0 : i64, scratch_operands = 0 : i64, tpu.core_type = #tpu.core_type<tc>} {
    %c0 = arith.constant 0 : index
    %c0_0 = arith.constant 0 : index
    %0 = vector.load %arg0[%c0, %c0_0] : memref<40x256xbf16, #tpu.memory_space<vmem>>, vector<40x256xbf16>
    %c0_1 = arith.constant 0 : index
    %c0_2 = arith.constant 0 : index
    %1 = vector.load %arg1[%c0_1, %c0_2] : memref<256x128xbf16, #tpu.memory_space<vmem>>, vector<256x128xbf16>
    %cst = arith.constant dense<0.000000e+00> : vector<40x128xf32>
    %2 = tpu.matmul %0, %1, %cst {dimension_numbers = #tpu.dot_dimension_numbers<[1], [0], [0], [1], [0, 0, 1, 1], [], []>} : vector<40x256xbf16>, vector<256x128xbf16>, vector<40x128xf32> -> vector<40x128xf32>
    %c128 = arith.constant 128 : index
    %c0_3 = arith.constant 0 : index
    %3 = vector.load %arg2[%c128, %c0_3] : memref<144x128xf32, #tpu.memory_space<vmem>>, vector<1x128xf32>
    %4 = vector.broadcast %3 : vector<1x128xf32> to vector<40x128xf32>
    %5 = arith.addf %2, %4 : vector<40x128xf32>
    %cst_4 = arith.constant 0.000000e+00 : f32
    %6 = vector.broadcast %cst_4 : f32 to vector<40x128xf32>
    %7 = arith.maximumf %5, %6 : vector<40x128xf32>
    %8 = arith.truncf %7 : vector<40x128xf32> to vector<40x128xbf16>
    %c136 = arith.constant 136 : index
    %c0_5 = arith.constant 0 : index
    %9 = vector.load %arg2[%c136, %c0_5] : memref<144x128xf32, #tpu.memory_space<vmem>>, vector<8x40xf32>
    %10 = arith.truncf %9 : vector<8x40xf32> to vector<8x40xbf16>
    %c0_6 = arith.constant 0 : index
    %c0_7 = arith.constant 0 : index
    %11 = vector.load %arg2[%c0_6, %c0_7] : memref<144x128xf32, #tpu.memory_space<vmem>>, vector<128x128xf32>
    %12 = arith.truncf %11 : vector<128x128xf32> to vector<128x128xbf16>
    %cst_8 = arith.constant dense<0.000000e+00> : vector<8x128xf32>
    %13 = tpu.matmul %10, %8, %cst_8 {dimension_numbers = #tpu.dot_dimension_numbers<[1], [0], [0], [1], [0, 0, 1, 1], [], []>} : vector<8x40xbf16>, vector<40x128xbf16>, vector<8x128xf32> -> vector<8x128xf32>
    %14 = arith.truncf %13 : vector<8x128xf32> to vector<8x128xbf16>
    %cst_9 = arith.constant dense<0.000000e+00> : vector<8x128xf32>
    %15 = tpu.matmul %14, %12, %cst_9 {dimension_numbers = #tpu.dot_dimension_numbers<[1], [0], [0], [1], [0, 0, 1, 1], [], []>} : vector<8x128xbf16>, vector<128x128xbf16>, vector<8x128xf32> -> vector<8x128xf32>
    %c129 = arith.constant 129 : index
    %c0_10 = arith.constant 0 : index
    %16 = vector.load %arg2[%c129, %c0_10] : memref<144x128xf32, #tpu.memory_space<vmem>>, vector<1x128xf32>
    %17 = vector.broadcast %16 : vector<1x128xf32> to vector<8x128xf32>
    %18 = arith.addf %15, %17 : vector<8x128xf32>
    %c0_11 = arith.constant 0 : index
    %c0_12 = arith.constant 0 : index
    %19 = vector.load %arg3[%c0_11, %c0_12] : memref<8x128xf32, #tpu.memory_space<vmem>>, vector<8x128xf32>
    tpu.vector_store %arg3[%c0_11, %c0_12], %18 {strides = array<i32>} : memref<8x128xf32, #tpu.memory_space<vmem>>, vector<8x128xf32>,
    return
  }
}

</mosaic_0001>

<llo_original>
// kernel: swag_forward.1
$region0: #{swag_forward.1}
  #allocation0 [shape = 'u32[]', space=smem, size = 0x4, offset = 0x4, fixed_abs, tag = 'smem constant byte address 0x4 - core index']
  #allocation1 [shape = 'u32[72,128]{1,0:T(1,128)}', space=vmem, size = 0x9000, scoped, tag = 'internal scratch']
  %s0 = inlined_call_operand.vmem [shape: bf16[40,256], index: 0, kind: input, shape index: {}]
  %s1 = inlined_call_operand.vmem [shape: bf16[256,128], index: 1, kind: input, shape index: {}]
  %s2 = inlined_call_operand.vmem [shape: f32[144,128], index: 2, kind: input, shape index: {}]
  %s3 = inlined_call_operand.vmem [shape: f32[8,128], index: 3, kind: output, shape index: {}]
  %s4 = sld [smem:[#allocation0]]
  $region22: #{swag_forward.1} parent=0
    _
  %s6 = ssub.s32 1, %s4
  %s7 = scalar_select 0, %s6, %s4
  // Predicated region
  $region2: #{swag_forward.1} parent=0 // pred_check
    _
  $region3: #{swag_forward.1} parent=0 // pred_check_branch
    %9 = sbr.rel (0) target = $region5
  $region4: #{swag_forward.1} parent=0 // pred_region
    _
  $region5: #{swag_forward.1} parent=0 // pred_fallthru
    _
  // Predicated region
  $region6: #{swag_forward.1} parent=0 // pred_check
    _
  $region7: #{swag_forward.1} parent=0 // pred_check_branch
    %11 = sbr.rel (0) target = $region9
  $region8: #{swag_forward.1} parent=0 // pred_region
    _
  $region9: #{swag_forward.1} parent=0 // pred_fallthru
    _
  // Predicated region
  $region10: #{swag_forward.1} parent=0 // pred_check
    _
  $region11: #{swag_forward.1} parent=0 // pred_check_branch
    %13 = sbr.rel (0) target = $region13
  $region12: #{swag_forward.1} parent=0 // pred_region
    _
  $region13: #{swag_forward.1} parent=0 // pred_fallthru
    _
  %v15 = vld [vmem:[%s0] sm:$0xff]
  %v16 = vld [vmem:[%s0 + $0x8] sm:$0xff]
  %v17 = vld [vmem:[%s0 + $0x10] sm:$0xff]
  %v18 = vld [vmem:[%s0 + $0x18] sm:$0xff]
  %v19 = vld [vmem:[%s0 + $0x20] sm:$0xff]
  %v20 = vld [vmem:[%s1] sm:$0xf]
  %v21 = vld [vmem:[%s1 + $0x4] sm:$0xf]
  %v22 = vld [vmem:[%s1 + $0x8] sm:$0xf]
  %v23 = vld [vmem:[%s1 + $0xc] sm:$0xf]
  %v24 = vld [vmem:[%s1 + $0x10] sm:$0xf]
  %v25 = vld [vmem:[%s1 + $0x14] sm:$0xf]
  %v26 = vld [vmem:[%s1 + $0x18] sm:$0xf]
  %v27 = vld [vmem:[%s1 + $0x1c] sm:$0xf]
  %v28 = vld [vmem:[%s1 + $0x20] sm:$0xf]
  %v29 = vld [vmem:[%s1 + $0x24] sm:$0xf]
  %v30 = vld [vmem:[%s1 + $0x28] sm:$0xf]
  %v31 = vld [vmem:[%s1 + $0x2c] sm:$0xf]
  %v32 = vld [vmem:[%s1 + $0x30] sm:$0xf]
  %v33 = vld [vmem:[%s1 + $0x34] sm:$0xf]
  %v34 = vld [vmem:[%s1 + $0x38] sm:$0xf]
  %v35 = vld [vmem:[%s1 + $0x3c] sm:$0xf]
  %v36 = vld [vmem:[%s1 + $0x40] sm:$0xf]
  %v37 = vld [vmem:[%s1 + $0x44] sm:$0xf]
  %v38 = vld [vmem:[%s1 + $0x48] sm:$0xf]
  %v39 = vld [vmem:[%s1 + $0x4c] sm:$0xf]
  %v40 = vld [vmem:[%s1 + $0x50] sm:$0xf]
  %v41 = vld [vmem:[%s1 + $0x54] sm:$0xf]
  %v42 = vld [vmem:[%s1 + $0x58] sm:$0xf]
  %v43 = vld [vmem:[%s1 + $0x5c] sm:$0xf]
  %v44 = vld [vmem:[%s1 + $0x60] sm:$0xf]
  %v45 = vld [vmem:[%s1 + $0x64] sm:$0xf]
  %v46 = vld [vmem:[%s1 + $0x68] sm:$0xf]
  %v47 = vld [vmem:[%s1 + $0x6c] sm:$0xf]
  %v48 = vld [vmem:[%s1 + $0x70] sm:$0xf]
  %v49 = vld [vmem:[%s1 + $0x74] sm:$0xf]
  %v50 = vld [vmem:[%s1 + $0x78] sm:$0xf]
  %v51 = vld [vmem:[%s1 + $0x7c] sm:$0xf]
  %v52 = vld [vmem:[%s2 + $0x80] sm:$0x1]
  %v53 = vperm.slane %v52, 0
  %v59 = vunpack.c.l.b16 %v15
  %v60 = vunpack.c.h.b16 %v15
  %v61 = vunpack.c.l.b16 %v16
  %v62 = vunpack.c.h.b16 %v16
  %v63 = vunpack.c.l.b16 %v17
  %v64 = vunpack.c.h.b16 %v17
  %v65 = vunpack.c.l.b16 %v18
  %v66 = vunpack.c.h.b16 %v18
  %v67 = vunpack.c.l.b16 %v19
  %v68 = vunpack.c.h.b16 %v19
  %v69 = vpack.c.b16 %v61, %v59
  %v70 = vpack.c.b16 %v62, %v60
  %v71 = vpack.c.b16 %v65, %v63
  %v72 = vpack.c.b16 %v66, %v64
  %v73 = vpack.c.b16 %v67, %v67
  %v74 = vpack.c.b16 %v68, %v68
  %v113 = vunpack.c.l.b16 %v20
  %v114 = vunpack.c.l.b16 %v21
  %v115 = vunpack.c.l.b16 %v22
  %v116 = vunpack.c.l.b16 %v23
  %v117 = vunpack.c.l.b16 %v24
  %v118 = vunpack.c.l.b16 %v25
  %v119 = vunpack.c.l.b16 %v26
  %v120 = vunpack.c.l.b16 %v27
  %v121 = vunpack.c.l.b16 %v28
  %v122 = vunpack.c.l.b16 %v29
  %v123 = vunpack.c.l.b16 %v30
  %v124 = vunpack.c.l.b16 %v31
  %v125 = vunpack.c.l.b16 %v32
  %v126 = vunpack.c.l.b16 %v33
  %v127 = vunpack.c.l.b16 %v34
  %v128 = vunpack.c.l.b16 %v35
  %v129 = vunpack.c.l.b16 %v36
  %v130 = vunpack.c.l.b16 %v37
  %v131 = vunpack.c.l.b16 %v38
  %v132 = vunpack.c.l.b16 %v39
  %v133 = vunpack.c.l.b16 %v40
  %v134 = vunpack.c.l.b16 %v41
  %v135 = vunpack.c.l.b16 %v42
  %v136 = vunpack.c.l.b16 %v43
  %v137 = vunpack.c.l.b16 %v44
  %v138 = vunpack.c.l.b16 %v45
  %v139 = vunpack.c.l.b16 %v46
  %v140 = vunpack.c.l.b16 %v47
  %v141 = vunpack.c.l.b16 %v48
  %v142 = vunpack.c.l.b16 %v49
  %v143 = vunpack.c.l.b16 %v50
  %v144 = vunpack.c.l.b16 %v51
  %v145 = vpack.c.b16 %v114, %v113
  %v146 = vpack.c.b16 %v116, %v115
  %v147 = vpack.c.b16 %v118, %v117
  %v148 = vpack.c.b16 %v120, %v119
  %v149 = vpack.c.b16 %v122, %v121
  %v150 = vpack.c.b16 %v124, %v123
  %v151 = vpack.c.b16 %v126, %v125
  %v152 = vpack.c.b16 %v128, %v127
  %v153 = vpack.c.b16 %v130, %v129
  %v154 = vpack.c.b16 %v132, %v131
  %v155 = vpack.c.b16 %v134, %v133
  %v156 = vpack.c.b16 %v136, %v135
  %v157 = vpack.c.b16 %v138, %v137
  %v158 = vpack.c.b16 %v140, %v139
  %v159 = vpack.c.b16 %v142, %v141
  %v160 = vpack.c.b16 %v144, %v143
  %177 = vmatpush.bf16.msra.mxu0 %v152
  %178 = vmatpush.bf16.msra.mxu0 %v151
  %179 = vmatpush.bf16.msra.mxu0 %v150
  %180 = vmatpush.bf16.msra.mxu0 %v149
  %181 = vmatpush.bf16.msra.mxu0 %v148
  %182 = vmatpush.bf16.msra.mxu0 %v147
  %183 = vmatpush.bf16.msra.mxu0 %v146
  %184 = vmatpush.bf16.msra.mxu0 %v145
  %185 = vmatmul.bf16.gmra.mxu0 %v69
  %v186 = vpop.f32.mrf.mxu0
  %v187 = vadd.f32 %v53, %v186
  %v188 = vpop.f32.mrf.mxu0
  %v189 = vadd.f32 %v53, %v188
  %190 = vmatmul.bf16.gmra.mxu0 %v71
  %v191 = vpop.f32.mrf.mxu0
  %v192 = vadd.f32 %v53, %v191
  %v193 = vpop.f32.mrf.mxu0
  %v194 = vadd.f32 %v53, %v193
  %195 = vmatmul.bf16.gmra.mxu0 %v73
  %v196 = vpop.f32.mrf.mxu0
  %v197 = vadd.f32 %v53, %v196
  %v198 = vpop.f32.mrf.mxu0
  %199 = vdwg.mxu0
  %200 = vmatpush.bf16.msra.mxu0 %v160
  %201 = vmatpush.bf16.msra.mxu0 %v159
  %202 = vmatpush.bf16.msra.mxu0 %v158
  %203 = vmatpush.bf16.msra.mxu0 %v157
  %204 = vmatpush.bf16.msra.mxu0 %v156
  %205 = vmatpush.bf16.msra.mxu0 %v155
  %206 = vmatpush.bf16.msra.mxu0 %v154
  %207 = vmatpush.bf16.msra.mxu0 %v153
  %208 = vmatmul.bf16.gmra.mxu0 %v70
  %v209 = vpop.f32.mrf.mxu0
  %v210 = vadd.f32 %v187, %v209
  %v211 = vpop.f32.mrf.mxu0
  %v212 = vadd.f32 %v189, %v211
  %213 = vmatmul.bf16.gmra.mxu0 %v72
  %v214 = vpop.f32.mrf.mxu0
  %v215 = vadd.f32 %v192, %v214
  %v216 = vpop.f32.mrf.mxu0
  %v217 = vadd.f32 %v194, %v216
  %218 = vmatmul.bf16.gmra.mxu0 %v74
  %v219 = vpop.f32.mrf.mxu0
  %v220 = vadd.f32 %v197, %v219
  %v221 = vpop.f32.mrf.mxu0
  %222 = vdwg.mxu0
  %v223 = vmax.f32 %v210, 0.0
  %v224 = vmax.f32 %v212, 0.0
  %v225 = vmax.f32 %v215, 0.0
  %v226 = vmax.f32 %v217, 0.0
  %v227 = vmax.f32 %v220, 0.0
  %v228 = vpack.c.bf16 %v224, %v223
  %v229 = vpack.c.bf16 %v226, %v225
  %v230 = vpack.c.bf16 %v227, %v227
  %v231 = vld [vmem:[%s2 + $0x88] sm:$0xff]
  %v232 = vpack.c.bf16 %v231, %v231
  %v233 = vld [vmem:[%s2] sm:$0xff]
  %v234 = vld [vmem:[%s2 + $0x8] sm:$0xff]
  %v235 = vld [vmem:[%s2 + $0x10] sm:$0xff]
  %v236 = vld [vmem:[%s2 + $0x18] sm:$0xff]
  %v237 = vld [vmem:[%s2 + $0x20] sm:$0xff]
  %v238 = vld [vmem:[%s2 + $0x28] sm:$0xff]
  %v239 = vld [vmem:[%s2 + $0x30] sm:$0xff]
  %v240 = vld [vmem:[%s2 + $0x38] sm:$0xff]
  %v241 = vld [vmem:[%s2 + $0x40] sm:$0xff]
  %v242 = vld [vmem:[%s2 + $0x48] sm:$0xff]
  %v243 = vld [vmem:[%s2 + $0x50] sm:$0xff]
  %v244 = vld [vmem:[%s2 + $0x58] sm:$0xff]
  %v245 = vld [vmem:[%s2 + $0x60] sm:$0xff]
  %v246 = vld [vmem:[%s2 + $0x68] sm:$0xff]
  %v247 = vld [vmem:[%s2 + $0x70] sm:$0xff]
  %v248 = vld [vmem:[%s2 + $0x78] sm:$0xff]
  %v249 = vpack.c.bf16 %v234, %v233
  %v250 = vpack.c.bf16 %v236, %v235
  %v251 = vpack.c.bf16 %v238, %v237
  %v252 = vpack.c.bf16 %v240, %v239
  %v253 = vpack.c.bf16 %v242, %v241
  %v254 = vpack.c.bf16 %v244, %v243
  %v255 = vpack.c.bf16 %v246, %v245
  %v256 = vpack.c.bf16 %v248, %v247
  %vm257 = vcmask 326656
  %v259 = vsel %vm257, %v232, 0
  %vm261 = vcmask 1043456
  %v263 = vsel %vm261, %v230, 0
  %265 = vmatpush.bf16.msra.mxu0 0
  %266 = vmatpush.bf16.msra.mxu0 0
  %267 = vmatpush.bf16.msra.mxu0 0
  %268 = vmatpush.bf16.msra.mxu0 0
  %269 = vmatpush.bf16.msra.mxu0 0
  %270 = vmatpush.bf16.msra.mxu0 %v263
  %271 = vmatpush.bf16.msra.mxu0 %v229
  %272 = vmatpush.bf16.msra.mxu0 %v228
  %273 = vmatmul.bf16.gmra.mxu0 %v259
  %v274 = vpop.f32.mrf.mxu0
  %v275 = vadd.f32 0.0, %v274
  %v276 = vpop.f32.mrf.mxu0
  %277 = vdwg.mxu0
  %v278 = vpack.c.bf16 %v275, %v275
  %v279 = vld [vmem:[%s2 + $0x81] sm:$0x1]
  %v280 = vperm.slane %v279, 0
  %281 = vmatpush.bf16.msra.mxu0 %v256
  %282 = vmatpush.bf16.msra.mxu0 %v255
  %283 = vmatpush.bf16.msra.mxu0 %v254
  %284 = vmatpush.bf16.msra.mxu0 %v253
  %285 = vmatpush.bf16.msra.mxu0 %v252
  %286 = vmatpush.bf16.msra.mxu0 %v251
  %287 = vmatpush.bf16.msra.mxu0 %v250
  %288 = vmatpush.bf16.msra.mxu0 %v249
  %289 = vmatmul.bf16.gmra.mxu0 %v278
  %v290 = vpop.f32.mrf.mxu0
  %v291 = vadd.f32 %v280, %v290
  %v292 = vpop.f32.mrf.mxu0
  %293 = vdwg.mxu0
  %294 = vst [vmem:[%s3] sm:$0xff] %v291
  // Predicated region
  $region14: #{swag_forward.1} parent=0 // pred_check
    _
  $region15: #{swag_forward.1} parent=0 // pred_check_branch
    %296 = sbr.rel (0) target = $region17
  $region16: #{swag_forward.1} parent=0 // pred_region
    _
  $region17: #{swag_forward.1} parent=0 // pred_fallthru
    _
  // Predicated region
  $region18: #{swag_forward.1} parent=0 // pred_check
    _
  $region19: #{swag_forward.1} parent=0 // pred_check_branch
    %298 = sbr.rel (0) target = $region21
  $region20: #{swag_forward.1} parent=0 // pred_region
    _
  $region21: #{swag_forward.1} parent=0 // pred_fallthru
    _

</llo_original>
